<compile_context>
chip_gen: v7x
topology: tpu7x:2x2x1
jax: 0.10.0
libtpu: 0.0.40
codegen_flags: <defaults>
</compile_context>

<pallas_src>
import functools

import jax
import jax.numpy as jnp
from jax.experimental import pallas as pl
from jax.experimental.pallas import tpu as pltpu

GAMMA = 2  # hardcoded -> pow implemented as an explicit square


def _round_up(x, m):
    return ((x + m - 1) // m) * m


def focal_loss_kernel(logits_ref, targets_ref, out_ref, *, n_rows, tile_n):
    """One batch tile: partial focal-loss sum -> lane-dense (8,128) output slab."""
    i = pl.program_id(0)

    x = logits_ref[...].astype(jnp.float32)               # (tile_n, C)
    t = targets_ref[...]                                   # (tile_n, 1) int32

    # Numerically stable log-softmax pieces (shift + logsumexp).
    m = jnp.max(x, axis=1, keepdims=True)                  # (tile_n, 1)
    shifted = x - m                                         # (tile_n, C)
    lse = jnp.log(jnp.sum(jnp.exp(shifted), axis=1, keepdims=True))  # (tile_n, 1)

    # Class gather on `shifted` (before forming full log-probs):
    #   logpt[row] = shifted[row, target[row]] - lse[row]
    col = jax.lax.broadcasted_iota(jnp.int32, x.shape, 1)   # (tile_n, C)
    sel = jnp.where(col == t, shifted, 0.0)
    logpt = jnp.sum(sel, axis=1, keepdims=True) - lse       # (tile_n, 1)

    pt = jnp.exp(logpt)
    one_minus_pt = 1.0 - pt
    loss = -(one_minus_pt * one_minus_pt) * logpt           # gamma == 2 -> square

    # Mask rows past the true batch size (last partial tile).
    row = jax.lax.broadcasted_iota(jnp.int32, loss.shape, 0) + i * tile_n
    loss = jnp.where(row < n_rows, loss, 0.0)

    partial = jnp.sum(loss)                                 # scalar partial sum

    # Lane-dense (8, 128) output slab: partial at [0, 0], zeros elsewhere.
    r = jax.lax.broadcasted_iota(jnp.int32, (8, 128), 0)
    c = jax.lax.broadcasted_iota(jnp.int32, (8, 128), 1)
    out_ref[...] = jnp.where((r == 0) & (c == 0), partial, 0.0)


def focal_loss(logits, targets, *, tile_n=None):
    """logits: (N, C) float; targets: (N,) int. Returns scalar f32 mean focal loss."""
    n, c = logits.shape
    if tile_n is None:
        # Cap the logits tile so double-buffered inputs + f32 temporaries stay
        # comfortably inside scoped VMEM on every generation (incl. v7x 64 MiB).
        lanes = max(c, 128)                                  # lane-padded class dim
        rows_by_vmem = max(8, (4 * 1024 * 1024) // (lanes * 4))
        tile_n = min(512, _round_up(n, 8), _round_up(rows_by_vmem, 8))
    num_tiles = pl.cdiv(n, tile_n)

    targets_2d = targets.astype(jnp.int32).reshape(n, 1)
    kernel = functools.partial(focal_loss_kernel, n_rows=n, tile_n=tile_n)

    out = pl.pallas_call(
        kernel,
        out_shape=jax.ShapeDtypeStruct((num_tiles * 8, 128), jnp.float32),
        grid_spec=pltpu.PrefetchScalarGridSpec(
            num_scalar_prefetch=0,
            grid=(num_tiles,),
            in_specs=[
                pl.BlockSpec((tile_n, c), lambda i: (i, 0)),
                pl.BlockSpec((tile_n, 1), lambda i: (i, 0)),
            ],
            out_specs=pl.BlockSpec((8, 128), lambda i: (i, 0)),
        ),
        compiler_params=pltpu.CompilerParams(
            dimension_semantics=("parallel",),
            vmem_limit_bytes=32 * 1024 * 1024,
        ),
        cost_estimate=pl.CostEstimate(
            flops=6 * n * c,
            transcendentals=n * c + 2 * n,
            bytes_accessed=n * c * logits.dtype.itemsize
            + n * 4
            + num_tiles * 8 * 128 * 4,
        ),
    )(logits, targets_2d)

    # Final mean over per-tile partial sums (true N, so partial tiles are correct).
    return jnp.sum(out) / jnp.float32(n)


def focal_loss_ref(logits, targets):
    x = logits.astype(jnp.float32)
    logp = jax.nn.log_softmax(x, axis=1)
    logpt = jnp.take_along_axis(logp, targets[:, None].astype(jnp.int32), axis=1)[:, 0]
    pt = jnp.exp(logpt)
    return jnp.mean(-((1.0 - pt) ** GAMMA) * logpt)


if __name__ == "__main__":
    key = jax.random.PRNGKey(0)
    k1, k2, k3, k4 = jax.random.split(key, 4)

    # Case 1: multi-tile batch (exercises the pipelined, parallel grid).
    N1, C1 = 32, 32
    logits1 = jax.random.normal(k1, (N1, C1), dtype=jnp.float32)
    targets1 = jax.random.randint(k2, (N1,), 0, C1, dtype=jnp.int32)
    out1 = jax.block_until_ready(focal_loss(logits1, targets1, tile_n=8))
    ref1 = focal_loss_ref(logits1, targets1)
    assert jnp.allclose(out1, ref1, rtol=1e-5, atol=1e-5), (out1, ref1)

    # Case 2: batch not divisible by the tile (exercises the row mask / true-N mean).
    N2, C2 = 19, 32
    logits2 = jax.random.normal(k3, (N2, C2), dtype=jnp.float32)
    targets2 = jax.random.randint(k4, (N2,), 0, C2, dtype=jnp.int32)
    out2 = jax.block_until_ready(focal_loss(logits2, targets2, tile_n=8))
    ref2 = focal_loss_ref(logits2, targets2)
    assert jnp.allclose(out2, ref2, rtol=1e-5, atol=1e-5), (out2, ref2)

    print("KERNEL_OK")
</pallas_src>

<mosaic_0001>
module attributes {stable_mosaic.version = 11 : i64} {
  func.func @focal_loss_kernel(%arg0: i32, %arg1: memref<8x32xf32, #tpu.memory_space<vmem>>, %arg2: memref<8x1xi32, #tpu.memory_space<vmem>>, %arg3: memref<8x128xf32, #tpu.memory_space<vmem>>) attributes {dimension_semantics = [#tpu.dimension_semantics<parallel>], iteration_bounds = array<i64: 4>, scalar_prefetch = 0 : i64, scratch_operands = 0 : i64, tpu.core_type = #tpu.core_type<tc>, window_params = [{transform_indices = @transform_0, window_bounds = array<i64: 8, 32>}, {transform_indices = @transform_1, window_bounds = array<i64: 8, 1>}, {transform_indices = @transform_2, window_bounds = array<i64: 8, 128>}]} {
    %c0 = arith.constant 0 : index
    %c0_0 = arith.constant 0 : index
    %0 = vector.load %arg1[%c0, %c0_0] : memref<8x32xf32, #tpu.memory_space<vmem>>, vector<8x32xf32>
    %c0_1 = arith.constant 0 : index
    %c0_2 = arith.constant 0 : index
    %1 = vector.load %arg2[%c0_1, %c0_2] : memref<8x1xi32, #tpu.memory_space<vmem>>, vector<8x1xi32>
    %cst = arith.constant dense<0xFF800000> : vector<8xf32>
    %2 = vector.multi_reduction <maximumf>, %0, %cst [1] : vector<8x32xf32> to vector<8xf32>
    %3 = vector.shape_cast %2 : vector<8xf32> to vector<8x1xf32>
    %4 = vector.broadcast %3 : vector<8x1xf32> to vector<8x32xf32>
    %5 = arith.subf %0, %4 : vector<8x32xf32>
    %6 = math.exp %5 : vector<8x32xf32>
    %cst_3 = arith.constant dense<0.000000e+00> : vector<8xf32>
    %7 = vector.multi_reduction <add>, %6, %cst_3 [1] : vector<8x32xf32> to vector<8xf32>
    %8 = vector.shape_cast %7 : vector<8xf32> to vector<8x1xf32>
    %9 = math.log %8 : vector<8x1xf32>
    %10 = tpu.iota {dimensions = array<i32: 1>} : vector<8x32xi32>
    %11 = vector.broadcast %1 : vector<8x1xi32> to vector<8x32xi32>
    %12 = arith.cmpi eq, %10, %11 : vector<8x32xi32>
    %cst_4 = arith.constant 0.000000e+00 : f32
    %13 = vector.broadcast %cst_4 : f32 to vector<8x32xf32>
    %14 = arith.select %12, %5, %13 : vector<8x32xi1>, vector<8x32xf32>
    %cst_5 = arith.constant dense<0.000000e+00> : vector<8xf32>
    %15 = vector.multi_reduction <add>, %14, %cst_5 [1] : vector<8x32xf32> to vector<8xf32>
    %16 = vector.shape_cast %15 : vector<8xf32> to vector<8x1xf32>
    %17 = arith.subf %16, %9 : vector<8x1xf32>
    %18 = math.exp %17 : vector<8x1xf32>
    %cst_6 = arith.constant 1.000000e+00 : f32
    %19 = vector.broadcast %cst_6 : f32 to vector<8x1xf32>
    %20 = arith.subf %19, %18 : vector<8x1xf32>
    %21 = arith.mulf %20, %20 : vector<8x1xf32>
    %cst_7 = arith.constant 0.000000e+00 : f32
    %22 = vector.broadcast %cst_7 : f32 to vector<8x1xf32>
    %23 = arith.subf %22, %21 : vector<8x1xf32>
    %24 = arith.mulf %23, %17 : vector<8x1xf32>
    %25 = tpu.iota {dimensions = array<i32: 0>} : vector<8x1xi32>
    %c8_i32 = arith.constant 8 : i32
    %26 = arith.muli %arg0, %c8_i32 : i32
    %27 = vector.broadcast %26 : i32 to vector<8x1xi32>
    %28 = arith.addi %25, %27 : vector<8x1xi32>
    %c32_i32 = arith.constant 32 : i32
    %29 = vector.broadcast %c32_i32 : i32 to vector<8x1xi32>
    %30 = arith.cmpi slt, %28, %29 : vector<8x1xi32>
    %cst_8 = arith.constant 0.000000e+00 : f32
    %31 = vector.broadcast %cst_8 : f32 to vector<8x1xf32>
    %32 = arith.select %30, %24, %31 : vector<8x1xi1>, vector<8x1xf32>
    %33 = vector.shape_cast %32 : vector<8x1xf32> to vector<1x8x1xf32>
    %cst_9 = arith.constant dense<0.000000e+00> : vector<1xf32>
    %34 = vector.multi_reduction <add>, %33, %cst_9 [1, 2] : vector<1x8x1xf32> to vector<1xf32>
    %35 = vector.shape_cast %34 : vector<1xf32> to vector<1x1x1xf32>
    %36 = vector.extract %35[0, 0, 0] : f32 from vector<1x1x1xf32>
    %37 = tpu.iota {dimensions = array<i32: 0>} : vector<8x128xi32>
    %38 = tpu.iota {dimensions = array<i32: 1>} : vector<8x128xi32>
    %c0_i32 = arith.constant 0 : i32
    %39 = vector.broadcast %c0_i32 : i32 to vector<8x128xi32>
    %40 = arith.cmpi eq, %37, %39 : vector<8x128xi32>
    %c0_i32_10 = arith.constant 0 : i32
    %41 = vector.broadcast %c0_i32_10 : i32 to vector<8x128xi32>
    %42 = arith.cmpi eq, %38, %41 : vector<8x128xi32>
    %43 = arith.andi %40, %42 : vector<8x128xi1>
    %cst_11 = arith.constant 0.000000e+00 : f32
    %44 = vector.broadcast %36 : f32 to vector<8x128xf32>
    %45 = vector.broadcast %cst_11 : f32 to vector<8x128xf32>
    %46 = arith.select %43, %44, %45 : vector<8x128xi1>, vector<8x128xf32>
    %c0_12 = arith.constant 0 : index
    %c0_13 = arith.constant 0 : index
    %47 = vector.load %arg3[%c0_12, %c0_13] : memref<8x128xf32, #tpu.memory_space<vmem>>, vector<8x128xf32>
    tpu.vector_store %arg3[%c0_12, %c0_13], %46 {strides = array<i32>} : memref<8x128xf32, #tpu.memory_space<vmem>>, vector<8x128xf32>,
    return
  }
  func.func @transform_0(%arg0: i32) -> (i32, i32) {
    %c0_i32 = arith.constant 0 : i32
    %c0_i32_0 = arith.constant 0 : i32
    return %arg0, %c0_i32 : i32, i32
  }
  func.func @transform_1(%arg0: i32) -> (i32, i32) {
    %c0_i32 = arith.constant 0 : i32
    %c0_i32_0 = arith.constant 0 : i32
    return %arg0, %c0_i32 : i32, i32
  }
  func.func @transform_2(%arg0: i32) -> (i32, i32) {
    %c0_i32 = arith.constant 0 : i32
    %c0_i32_0 = arith.constant 0 : i32
    return %arg0, %c0_i32 : i32, i32
  }
}

</mosaic_0001>

<llo_original>
// kernel: tpu_custom_call.1
$region0: #{tpu_custom_call.1}
  #allocation0 [shape = 'u32[]', space=smem, size = 0x4, offset = 0x4, fixed_abs, tag = 'smem constant byte address 0x4 - core index']
  #allocation1 [shape = 'u32[144,128]{1,0:T(1,128)}', space=vmem, size = 0x12000, scoped, tag = 'internal scratch']
  %s0 = inlined_call_operand.vmem [shape: f32[32,32], index: 0, kind: input, shape index: {}]
  %s1 = inlined_call_operand.vmem [shape: s32[32,1], index: 1, kind: input, shape index: {}]
  %s2 = inlined_call_operand.hbm [shape: f32[32,128], index: 2, kind: output, shape index: {}]
  %s3 = sld [smem:[#allocation0]]
  $region41: #{tpu_custom_call.1} parent=0
    _
  %s5 = ssub.s32 1, %s3
  %s6 = scalar_select 0, %s5, %s3
  $region1: #{tpu_custom_call.1} parent=0
    #allocation2 [shape = 'u8[8192]{0}', space=vmem, size = 0x2000, scoped, tag = 'output window, operand 0']
    #allocation3 [shape = 's32[2]{0}', space=sflag, size = 0x8, scoped, tag = 'scoped memory for tpu_custom_call.1']
    %7 = vsyncpa [#allocation3], 0
    %s8 = scalar_lea.sflag [#allocation3], 1
    %9 = vsyncpa %s8, 0
    loop: start=0, step=1, limit=6
    $region2: #{tpu_custom_call.1} parent=1 // loop_pre_header
      _
    $region3: #{tpu_custom_call.1} parent=1 // loop_header
      %s11 = sphi 0, %s15
      %p12 = scmp.ge.s32.totalorder %s11, 6
      %s21 = sphi 0, %s23
      %s24 = sphi 0, %s21
      %s25 = sphi 0, %s24
      %s41 = sphi 0, %s25
      %s47 = sphi 0, %s49
      %s50 = sphi 0, %s47
      %s51 = sphi 0, %s50
      %s67 = sphi 0, %s51
      %s73 = sphi 0, %s75
      %s76 = sphi 0, %s73
      %s77 = sphi 0, %s76
      %s93 = sphi 0, %s77
    $region4: #{tpu_custom_call.1} parent=1 // loop_header_branch
      %14 = sbr.rel (%p12) target = $region8
    $region5: #{tpu_custom_call.1} parent=1 // loop_body
      %s16 = ssub.s32 %s11, 1
      %s17 = ssub.s32 %s11, 2
      %s18 = sadd.s32 %s11, 1
      %s19 = ssub.s32 %s11, %s18
      %p20 = scmp.eq.s32.totalorder %s19, 0
      %s22 = sadd.s32 %s21, 1
      %s23 = scalar_select %p20, %s21, %s22
      %p26 = pneg %p20
      %p27 = scmp.eq.s32.totalorder %s11, 3
      %p28 = por %p26, %p27
      %p29 = scmp.ne.s32.totalorder %s21, %s24
      %p30 = scmp.eq.s32.totalorder %s11, 0
      %p31 = por %p29, %p30
      %p32 = scmp.ne.s32.totalorder %s21, %s24
      %p33 = scmp.eq.s32.totalorder %s16, 3
      %p34 = por %p32, %p33
      %p35 = scmp.ne.s32.totalorder %s24, %s25
      %p36 = scmp.eq.s32.totalorder %s16, 0
      %p37 = por %p35, %p36
      %p38 = scmp.ne.s32.totalorder %s24, %s25
      %p39 = scmp.eq.s32.totalorder %s17, 3
      %p40 = por %p38, %p39
      %p42 = scmp.ne.s32.totalorder %s25, %s41
      %p43 = scmp.eq.s32.totalorder %s17, 0
      %p44 = por %p42, %p43
      %s45 = ssub.s32 %s11, %s18
      %p46 = scmp.eq.s32.totalorder %s45, 0
      %s48 = sadd.s32 %s47, 1
      %s49 = scalar_select %p46, %s47, %s48
      %p52 = pneg %p46
      %p53 = scmp.eq.s32.totalorder %s11, 3
      %p54 = por %p52, %p53
      %p55 = scmp.ne.s32.totalorder %s47, %s50
      %p56 = scmp.eq.s32.totalorder %s11, 0
      %p57 = por %p55, %p56
      %p58 = scmp.ne.s32.totalorder %s47, %s50
      %p59 = scmp.eq.s32.totalorder %s16, 3
      %p60 = por %p58, %p59
      %p61 = scmp.ne.s32.totalorder %s50, %s51
      %p62 = scmp.eq.s32.totalorder %s16, 0
      %p63 = por %p61, %p62
      %p64 = scmp.ne.s32.totalorder %s50, %s51
      %p65 = scmp.eq.s32.totalorder %s17, 3
      %p66 = por %p64, %p65
      %p68 = scmp.ne.s32.totalorder %s51, %s67
      %p69 = scmp.eq.s32.totalorder %s17, 0
      %p70 = por %p68, %p69
      %s71 = ssub.s32 %s11, %s18
      %p72 = scmp.eq.s32.totalorder %s71, 0
      %s74 = sadd.s32 %s73, 1
      %s75 = scalar_select %p72, %s73, %s74
      %p78 = pneg %p72
      %p79 = scmp.eq.s32.totalorder %s11, 3
      %p80 = por %p78, %p79
      %p81 = scmp.ne.s32.totalorder %s73, %s76
      %p82 = scmp.eq.s32.totalorder %s11, 0
      %p83 = por %p81, %p82
      %p84 = scmp.ne.s32.totalorder %s73, %s76
      %p85 = scmp.eq.s32.totalorder %s16, 3
      %p86 = por %p84, %p85
      %p87 = scmp.ne.s32.totalorder %s76, %s77
      %p88 = scmp.eq.s32.totalorder %s16, 0
      %p89 = por %p87, %p88
      %p90 = scmp.ne.s32.totalorder %s76, %s77
      %p91 = scmp.eq.s32.totalorder %s17, 3
      %p92 = por %p90, %p91
      %p94 = scmp.ne.s32.totalorder %s77, %s93
      %p95 = scmp.eq.s32.totalorder %s17, 0
      %p96 = por %p94, %p95
      %p97 = scmp.le.s32.totalorder 1, %s11
      %p98 = scmp.lt.s32.totalorder %s11, 5
      %p99 = pnand %p97, %p98
      %p100 = pneg %p99
      // Predicated region
      $region9: #{tpu_custom_call.1} parent=5 // pred_check
        _
      $region10: #{tpu_custom_call.1} parent=5 // pred_check_branch
        %102 = sbr.rel (%p99) target = $region12
      $region11: #{tpu_custom_call.1} parent=5 // pred_region
        %s103 = ssub.s32 %s11, 1
      $region12: #{tpu_custom_call.1} parent=5 // pred_fallthru
        _
      %p104 = scmp.lt.s32.totalorder %s11, 4
      // Predicated region
      $region13: #{tpu_custom_call.1} parent=5 // pred_check
        %p105 = pneg %p104
      $region14: #{tpu_custom_call.1} parent=5 // pred_check_branch
        %107 = sbr.rel (%p105) target = $region16
      $region15: #{tpu_custom_call.1} parent=5 // pred_region
        // Predicated region
        $region17: #{tpu_custom_call.1} parent=15 // pred_check
          %p108 = pneg %p31
        $region18: #{tpu_custom_call.1} parent=15 // pred_check_branch
          %110 = sbr.rel (%p108) target = $region20
        $region19: #{tpu_custom_call.1} parent=15 // pred_region
          %p111 = scmp.lt.s32.totalorder %s11, 3
          %s112 = scalar_select %p111, %s11, 3
          %s113 = smul.addr %s112, 8
          %s114 = scalar_lea.vmem %s0, %s113
        $region20: #{tpu_custom_call.1} parent=15 // pred_fallthru
          _
        // Predicated region
        $region21: #{tpu_custom_call.1} parent=15 // pred_check
          %p115 = pneg %p57
        $region22: #{tpu_custom_call.1} parent=15 // pred_check_branch
          %117 = sbr.rel (%p115) target = $region24
        $region23: #{tpu_custom_call.1} parent=15 // pred_region
          %p118 = scmp.lt.s32.totalorder %s11, 3
          %s119 = scalar_select %p118, %s11, 3
          %s120 = smul.addr %s119, 8
          %s121 = scalar_lea.vmem %s1, %s120
        $region24: #{tpu_custom_call.1} parent=15 // pred_fallthru
          _
      $region16: #{tpu_custom_call.1} parent=5 // pred_fallthru
        _
      %p122 = scmp.le.s32.totalorder 1, %s11
      %p123 = scmp.lt.s32.totalorder %s11, 5
      %p124 = pnand %p122, %p123
      %p125 = pneg %p124
      // Predicated region
      $region25: #{tpu_custom_call.1} parent=5 // pred_check
        _
      $region26: #{tpu_custom_call.1} parent=5 // pred_check_branch
        %127 = sbr.rel (%p124) target = $region28
      $region27: #{tpu_custom_call.1} parent=5 // pred_region
        %s128 = ssub.s32 %s11, 1
        %p129 = scmp.lt.s32.totalorder %s16, 3
        %s130 = scalar_select %p129, %s16, 3
        %s131 = smul.addr %s130, 8
        %s132 = scalar_lea.vmem %s0, %s131
        %p133 = pneg %p37
        %p134 = pneg %p34
        %p135 = scmp.lt.s32.totalorder %s16, 3
        %s136 = scalar_select %p135, %s16, 3
        %s137 = smul.addr %s136, 8
        %s138 = scalar_lea.vmem %s1, %s137
        %p139 = pneg %p63
        %p140 = pneg %p60
        %p141 = pneg %p89
        %p142 = pneg %p86
        %s143 = sand.u32 %s76, 1
        %s144 = scalar_lea.sflag [#allocation3], %s143
        %s145 = sand.u32 %s76, 1
        %s146 = smul.addr %s145, 8
        %s147 = scalar_lea.vmem [#allocation2], %s146
        %p148 = scmp.lt.s32.totalorder %s16, 3
        %s149 = scalar_select %p148, %s16, 3
        %s150 = smul.addr %s149, 8
        %s151 = scalar_lea.vmem %s0, %s150
        %p152 = scmp.lt.s32.totalorder %s16, 3
        %s153 = scalar_select %p152, %s16, 3
        %s154 = smul.addr %s153, 8
        %s155 = scalar_lea.vmem %s1, %s154
        %v156 = vld [vmem:[%s151] sm:$0xff]
        %v157 = vld [vmem:[%s155] sm:$0xff]
        %vm158 = vcmask 261120
        %v159 = vsel %vm158, %v156, -inf
        %160 = vmax.xlane.f32.xlu0 %v159
        %v161 = vpop.xlane.xlu0 %160
        %v162 = vsub.f32 %v156, %v161
        %v163 = vmul.f32 %v162, 1.442695
        %v164 = vpow.pop %v163
        %v165 = vsel %vm158, %v164, 0.0
        %166 = vadd.xlane.f32.xlu0 %v165
        %v167 = vpop.xlane.xlu0 %166
        %v168 = vlog2.pop %v167
        %v169 = vmul.f32 %v168, 0.6931472
        %v170 = vlaneseq
        %v171 = vand.u32 %v170, 127
        %172 = vset.pattern.permute.xlu0 0
        %173 = vperm.xlu0 %172, %v157
        %v174 = vpop.permute.xlu0 %173
        %vm175 = vcmp.eq.s32.totalorder %v171, %v174
        %v176 = vsel %vm175, %v162, 0.0
        %v177 = vsel %vm158, %v176, 0.0
        %178 = vadd.xlane.f32.xlu0 %v177
        %v179 = vpop.xlane.xlu0 %178
        %v180 = vsub.f32 %v179, %v169
        %v181 = vmul.f32 %v180, 1.442695
        %v182 = vpow.pop %v181
        %v183 = vsub.f32 1.0, %v182
        %v184 = vmul.f32 %v183, %v183
        %v185 = vsub.f32 0.0, %v184
        %v186 = vmul.f32 %v185, %v180
        %v187 = vlaneseq
        %v188 = vshrl.u32 %v187, 7
        %s189 = smul.u32 %s16, 8
        %v190 = vstv %s189
        %v191 = vadd.s32 %v188, %v190
        %vm192 = vcmp.lt.s32.totalorder %v191, 32
        %v193 = vsel %vm192, %v186, 0.0
        %vm194 = vcmask 7168
        %v195 = vsel %vm194, %v193, 0.0
        %196 = vadd.xlane.f32.xlu0 %v195
        %v197 = vpop.xlane.xlu0 %196
        %v198 = vrot.slane %v197, 4
        %v199 = vadd.f32 %v197, %v198
        %v200 = vrot.slane %v199, 2
        %v201 = vadd.f32 %v199, %v200
        %v202 = vrot.slane %v201, 1
        %v203 = vadd.f32 %v201, %v202
        %s204 = vtos %v203
        %vm205 = vcmp.eq.s32.totalorder %v188, 0
        %vm206 = vcmp.eq.s32.totalorder %v171, 0
        %vm207 = vmand %vm205, %vm206
        %v208 = vstv %s204
        %v209 = vsel %vm207, %v208, 0.0
        %210 = vst [vmem:[%s147] sm:$0xff] %v209
        %s211 = sand.u32 %s76, 1
        %s212 = scalar_lea.sflag [#allocation3], %s211
        %s213 = sand.u32 %s76, 1
        %s214 = smul.addr %s213, 8
        %s215 = scalar_lea.vmem [#allocation2], %s214
        // Predicated region
        $region29: #{tpu_custom_call.1} parent=27 // pred_check
          %p216 = pneg %p86
        $region30: #{tpu_custom_call.1} parent=27 // pred_check_branch
          %218 = sbr.rel (%p216) target = $region32
        $region31: #{tpu_custom_call.1} parent=27 // pred_region
          %s220 = ssub.s32 128, 128
          %221 = vsyncadd %s212, %s220
          %s222 = smul.addr %s16, 128
          %s223 = scalar_lea.hbm %s2, %s222
          %s225 = sshll.u32 %s215, 4
          %s226 = int_to_ptr.vmem [resolvable:$true] %s225
          %228 = dma.vmem_to_hbm [thread:$0]  %s226, 128, %s223, %s212
        $region32: #{tpu_custom_call.1} parent=27 // pred_fallthru
          _
      $region28: #{tpu_custom_call.1} parent=5 // pred_fallthru
        _
      %p229 = scmp.le.s32.totalorder 2, %s11
      // Predicated region
      $region33: #{tpu_custom_call.1} parent=5 // pred_check
        %p230 = pneg %p229
      $region34: #{tpu_custom_call.1} parent=5 // pred_check_branch
        %232 = sbr.rel (%p230) target = $region36
      $region35: #{tpu_custom_call.1} parent=5 // pred_region
        %s233 = ssub.s32 %s11, 2
        // Predicated region
        $region37: #{tpu_custom_call.1} parent=35 // pred_check
          %p234 = pneg %p92
        $region38: #{tpu_custom_call.1} parent=35 // pred_check_branch
          %236 = sbr.rel (%p234) target = $region40
        $region39: #{tpu_custom_call.1} parent=35 // pred_region
          %s237 = sand.u32 %s77, 1
          %s238 = scalar_lea.sflag [#allocation3], %s237
          %s239 = sand.u32 %s77, 1
          %s240 = smul.addr %s239, 8
          %s241 = scalar_lea.vmem [#allocation2], %s240
          %242 = dma.done %s238, 128
        $region40: #{tpu_custom_call.1} parent=35 // pred_fallthru
          _
      $region36: #{tpu_custom_call.1} parent=5 // pred_fallthru
        _
    $region6: #{tpu_custom_call.1} parent=1 // loop_footer
      %s15 = sadd.s32 1, %s11
    $region7: #{tpu_custom_call.1} parent=1 // loop_footer_branch
      %10 = sbr.rel target = $region3
    $region8: #{tpu_custom_call.1} parent=1 // loop_exit
      _
    %243 = vsyncpa [#allocation3], 1
    %s244 = scalar_lea.sflag [#allocation3], 1
    %245 = vsyncpa %s244, 1

</llo_original>
